<compile_context>
chip_gen: v7x
topology: tpu7x:2x2x1
jax: 0.10.0
libtpu: 0.0.40
codegen_flags: <defaults>
</compile_context>

<pallas_src>
import functools

import numpy as np
import jax
import jax.numpy as jnp
from jax.experimental import pallas as pl
from jax.experimental.pallas import tpu as pltpu


IMAGENET_MEAN = np.array([0.485, 0.456, 0.406], np.float32)
IMAGENET_STD = np.array([0.229, 0.224, 0.225], np.float32)
LANE = 128


def _round_up(x, m):
    return -(-x // m) * m


# ------------------------- Pallas kernels -------------------------

def _conv3x3_kernel(x_ref, nxt_ref, w_ref, b_ref, o_ref, *, th, Wp, relu):
    # x_ref:   (1, th, Wp, Cin) bf16   -- main row band of the padded image
    # nxt_ref: (1, 8,  Wp, Cin) bf16   -- next row block (only rows 0..2 used)
    # w_ref:   (9, Cin, Cout)   bf16   -- one (Cin, Cout) matrix per (ky,kx) tap
    # b_ref:   (1, Cout)        f32
    # o_ref:   (1, th, Wp, Cout)       -- cols >= W are garbage, sliced off in XLA
    cin = x_ref.shape[-1]
    cout = o_ref.shape[-1]

    main = x_ref[0].reshape(th * Wp, cin)          # Wp % 8 == 0 -> layout-free
    halo = nxt_ref[0, :3].reshape(3 * Wp, cin)
    x2 = jnp.concatenate([main, halo], axis=0)     # ((th+3)*Wp, Cin), contiguous rows

    acc = None
    for kx in range(3):
        # column shift as a flattened row shift; garbage only lands in pad cols
        xs = x2[kx:kx + (th + 2) * Wp]
        for ky in range(3):
            lhs = xs[ky * Wp:(ky + th) * Wp]       # 8-aligned row slice: free
            part = jnp.dot(lhs, w_ref[ky * 3 + kx],
                           preferred_element_type=jnp.float32)
            acc = part if acc is None else acc + part
    acc = acc + b_ref[...]
    if relu:
        acc = jnp.maximum(acc, 0.0)
    o_ref[0] = acc.reshape(th, Wp, cout).astype(o_ref.dtype)


def _l1_kernel(a_ref, b_ref, o_ref, acc_ref, *, inv_n):
    i = pl.program_id(0)

    @pl.when(i == 0)
    def _():
        acc_ref[...] = jnp.zeros_like(acc_ref)

    d = jnp.abs(a_ref[...].astype(jnp.float32) - b_ref[...].astype(jnp.float32))
    # (rows,128) -> (rows/8, 8, 128) and reduce the outer axis: VALU-only adds.
    acc_ref[...] += jnp.sum(d.reshape(-1, 8, LANE), axis=0)

    @pl.when(i == pl.num_programs(0) - 1)
    def _():
        o_ref[...] = jnp.sum(acc_ref[...], keepdims=True) * inv_n


def _gram_mse_kernel(x_ref, o_ref, acc_ref, *, C, inv_chw, inv_ncc):
    # x_ref: (G, 2C, Lp) bf16  -- fake & real features stacked along channels.
    i = pl.program_id(0)

    @pl.when(i == 0)
    def _():
        acc_ref[...] = jnp.zeros_like(acc_ref)

    x = x_ref[...]
    # One 128-wide F @ F^T per RoI; ga / gb are the diagonal CxC blocks.
    g = jnp.einsum('ncl,ndl->ncd', x, x, preferred_element_type=jnp.float32)
    d = (g[:, :C, :C] - g[:, C:, C:]) * inv_chw
    acc_ref[...] += jnp.sum(d * d, axis=0)          # (C, C) accumulator

    @pl.when(i == pl.num_programs(0) - 1)
    def _():
        o_ref[...] = jnp.sum(acc_ref[...], keepdims=True) * inv_ncc


# ------------------------- wrappers around pallas_call -------------------------

def conv3x3_nhwc(x, w9, bias, *, pad_value=None, relu=True, row_tile=16,
                 out_dtype=jnp.bfloat16):
    """3x3 conv, stride 1, pad 1, channels-last, fused bias + ReLU.

    x: (B, H, W, Cin); w9: (9, Cin, Cout) (tap-major ky*3+kx); bias: (1, Cout).
    pad_value: per-channel spatial padding value (None -> zeros).
    """
    B, H, W, Cin = x.shape
    nine, Cin2, Cout = w9.shape
    assert nine == 9 and Cin2 == Cin

    th = row_tile
    assert th % 8 == 0 and th >= 8
    nb = -(-H // th)
    R = (nb + 1) * th                    # extra trailing block feeds the halo spec
    Wp = _round_up(W + 2, 8)             # width padded so in-kernel reshapes are free

    # Spatial pad: 1 top row / 1 left col, rest bottom/right.  For conv1 the pad
    # value is the raw pixel that normalizes to exactly 0 (norm folded into w/b).
    if pad_value is None:
        xp = jnp.pad(x, ((0, 0), (1, R - H - 1), (1, Wp - W - 1), (0, 0)))
    else:
        pv = jnp.asarray(pad_value, x.dtype).reshape(1, 1, 1, Cin)
        xp = jnp.pad(x - pv, ((0, 0), (1, R - H - 1), (1, Wp - W - 1), (0, 0))) + pv
    xp = xp.astype(jnp.bfloat16)

    out = pl.pallas_call(
        functools.partial(_conv3x3_kernel, th=th, Wp=Wp, relu=relu),
        out_shape=jax.ShapeDtypeStruct((B, nb * th, Wp, Cout), out_dtype),
        grid=(B, nb),
        in_specs=[
            # main band: rows [i*th, i*th+th)
            pl.BlockSpec((1, th, Wp, Cin), lambda b, i: (b, i, 0, 0)),
            # halo: first rows of the next 8-row block (same array, 2nd spec)
            pl.BlockSpec((1, 8, Wp, Cin),
                         lambda b, i, _t=th // 8: (b, (i + 1) * _t, 0, 0)),
            pl.BlockSpec((9, Cin, Cout), lambda b, i: (0, 0, 0)),
            pl.BlockSpec((1, Cout), lambda b, i: (0, 0)),
        ],
        out_specs=pl.BlockSpec((1, th, Wp, Cout), lambda b, i: (b, i, 0, 0)),
        compiler_params=pltpu.CompilerParams(
            dimension_semantics=("parallel", "parallel"),
            vmem_limit_bytes=64 * 1024 * 1024),
    )(xp, xp, w9, bias)
    return out[:, :H, :W, :]


def l1_mean(a, b, *, row_tile=256):
    n = int(a.size)
    af = a.reshape(-1)
    bf = b.reshape(-1)
    rows = -(-n // LANE)
    rows_p = _round_up(rows, row_tile)
    pad = rows_p * LANE - n
    if pad:
        af = jnp.pad(af, (0, pad))
        bf = jnp.pad(bf, (0, pad))
    a2 = af.reshape(rows_p, LANE)
    b2 = bf.reshape(rows_p, LANE)
    out = pl.pallas_call(
        functools.partial(_l1_kernel, inv_n=1.0 / n),
        out_shape=jax.ShapeDtypeStruct((1, 1), jnp.float32),
        grid=(rows_p // row_tile,),
        in_specs=[pl.BlockSpec((row_tile, LANE), lambda i: (i, 0)),
                  pl.BlockSpec((row_tile, LANE), lambda i: (i, 0))],
        out_specs=pl.BlockSpec((1, 1), lambda i: (0, 0)),
        scratch_shapes=[pltpu.VMEM((8, LANE), jnp.float32)],
        compiler_params=pltpu.CompilerParams(
            dimension_semantics=("arbitrary",)),
    )(a2, b2)
    return out[0, 0]


def gram_mse_loss(fa, fb, *, group=4):
    # fa, fb: (N, ph, pw, C) channels-last RoI-aligned feature crops.
    N, ph, pw, C = fa.shape
    L = ph * pw
    Lp = _round_up(L, LANE)                 # zero-padding L does not change F@F^T
    xa = jnp.transpose(fa, (0, 3, 1, 2)).reshape(N, C, L)
    xb = jnp.transpose(fb, (0, 3, 1, 2)).reshape(N, C, L)
    x = jnp.concatenate([xa, xb], axis=1).astype(jnp.bfloat16)   # (N, 2C, L)
    if Lp != L:
        x = jnp.pad(x, ((0, 0), (0, 0), (0, Lp - L)))
    G = min(N, group)
    Np = _round_up(N, G)
    if Np != N:                              # zero RoIs contribute 0 to the loss
        x = jnp.pad(x, ((0, Np - N), (0, 0), (0, 0)))
    out = pl.pallas_call(
        functools.partial(_gram_mse_kernel, C=C,
                          inv_chw=1.0 / (C * L), inv_ncc=1.0 / (N * C * C)),
        out_shape=jax.ShapeDtypeStruct((1, 1), jnp.float32),
        grid=(Np // G,),
        in_specs=[pl.BlockSpec((G, 2 * C, Lp), lambda i: (i, 0, 0))],
        out_specs=pl.BlockSpec((1, 1), lambda i: (0, 0)),
        scratch_shapes=[pltpu.VMEM((C, C), jnp.float32)],
        compiler_params=pltpu.CompilerParams(
            dimension_semantics=("arbitrary",)),
    )(x)
    return out[0, 0]


# ------------------------- RoIAlign (plain JAX/numpy glue) -------------------------

def _interp_params(coords, size):
    n = len(coords)
    lo = np.zeros(n, np.int32)
    hi = np.zeros(n, np.int32)
    w_lo = np.zeros(n, np.float32)
    w_hi = np.zeros(n, np.float32)
    for k, c in enumerate(coords):
        c = float(c)
        if c < -1.0 or c > size:
            continue                      # sample contributes zero
        c = max(c, 0.0)
        l = int(np.floor(c))
        if l >= size - 1:
            l = h = size - 1
            c = float(l)
        else:
            h = l + 1
        frac = c - l
        lo[k], hi[k] = l, h
        w_lo[k], w_hi[k] = 1.0 - frac, frac
    return lo, hi, w_lo, w_hi


def roi_align(feat, bbox, out_hw, spatial_scale=1.0):
    # torchvision RoIAlign semantics: aligned=True, sampling_ratio=-1.
    # feat: (H, W, C) channels-last.
    # TODO(synk): the data-dependent bilinear gather of RoIAlign has no clean
    # static-tile Pallas formulation for arbitrary boxes; kept in plain JAX.
    H, W, C = feat.shape
    ph, pw = out_hw
    x1 = float(bbox[0]) * spatial_scale - 0.5
    y1 = float(bbox[1]) * spatial_scale - 0.5
    x2 = float(bbox[2]) * spatial_scale - 0.5
    y2 = float(bbox[3]) * spatial_scale - 0.5
    roi_w, roi_h = x2 - x1, y2 - y1
    bin_h, bin_w = roi_h / ph, roi_w / pw
    gh = max(int(np.ceil(roi_h / ph)), 1)
    gw = max(int(np.ceil(roi_w / pw)), 1)
    ys = np.array([y1 + p * bin_h + (g + 0.5) * bin_h / gh
                   for p in range(ph) for g in range(gh)], np.float64)
    xs = np.array([x1 + p * bin_w + (g + 0.5) * bin_w / gw
                   for p in range(pw) for g in range(gw)], np.float64)
    ylo, yhi, wyl, wyh = _interp_params(ys, H)
    xlo, xhi, wxl, wxh = _interp_params(xs, W)
    fy = (feat[ylo, :, :] * wyl[:, None, None]
          + feat[yhi, :, :] * wyh[:, None, None])            # (ph*gh, W, C)
    fyx = (fy[:, xlo, :] * wxl[None, :, None]
           + fy[:, xhi, :] * wxh[None, :, None])             # (ph*gh, pw*gw, C)
    fyx = fyx.reshape(ph, gh, pw, gw, C)
    return fyx.mean(axis=(1, 3))                             # (ph, pw, C)


# ------------------------- model -------------------------

ROI_OUTPUT_SIZE = [[16, 16], [16, 7], [16, 7], [32, 32], [32, 7], [32, 7], [16, 16]]


def init_vgg_params(key):
    # vgg19.features[0..3] (perceptual_layers=3):
    #   Conv2d(3, 64, 3, pad=1) -> ReLU -> Conv2d(64, 64, 3, pad=1) -> ReLU
    k1, k2 = jax.random.split(key)
    w1 = jax.random.normal(k1, (64, 3, 3, 3), jnp.float32) * 0.08
    b1 = jnp.zeros((64,), jnp.float32)
    w2 = jax.random.normal(k2, (64, 64, 3, 3), jnp.float32) * 0.04
    b2 = jnp.zeros((64,), jnp.float32)
    return (w1, b1, w2, b2)


def prepare_vgg_params(vgg_params, cout_pad=128):
    """Fold ImageNet normalization into conv1 and pad channels to 128 (lane-dense)."""
    w1, b1, w2, b2 = vgg_params
    mean = jnp.asarray(IMAGENET_MEAN)
    std = jnp.asarray(IMAGENET_STD)
    scale = 1.0 / (2.0 * std)                     # norm(x) = x*scale + shift
    shift = (0.5 - mean) / std
    w1f = w1 * scale[None, :, None, None]
    b1f = b1 + jnp.einsum('ocyx,c->o', w1, shift)

    c1o = w1.shape[0]
    c2o, c2i = w2.shape[0], w2.shape[1]
    w1p = jnp.zeros((cout_pad,) + w1.shape[1:], jnp.float32).at[:c1o].set(w1f)
    b1p = jnp.zeros((cout_pad,), jnp.float32).at[:c1o].set(b1f)
    w2p = jnp.zeros((cout_pad, cout_pad, 3, 3), jnp.float32).at[:c2o, :c2i].set(w2)
    b2p = jnp.zeros((cout_pad,), jnp.float32).at[:c2o].set(b2)

    def to_k(w):  # (Cout, Cin, 3, 3) -> (9, Cin, Cout) tap-major, bf16 MXU operand
        co, ci = w.shape[0], w.shape[1]
        return jnp.transpose(w, (2, 3, 1, 0)).reshape(9, ci, co).astype(jnp.bfloat16)

    return dict(w1=to_k(w1p), b1=b1p.reshape(1, cout_pad),
                w2=to_k(w2p), b2=b2p.reshape(1, cout_pad),
                # raw-pixel value whose folded normalization is exactly 0
                # (matches zero-padding of the *normalized* input in PyTorch):
                pad1=2.0 * mean - 1.0,
                valid_cout=c2o)


def vgg_submodel(x_nchw, prepared):
    # single small NCHW->NHWC transpose of the 3-channel image; features
    # stay channels-last through both convs.
    x = jnp.transpose(x_nchw, (0, 2, 3, 1))
    y = conv3x3_nhwc(x, prepared['w1'], prepared['b1'],
                     pad_value=prepared['pad1'], relu=True)
    y = conv3x3_nhwc(y, prepared['w2'], prepared['b2'],
                     pad_value=None, relu=True)
    return y[..., :prepared['valid_cout']]        # (B, H, W, 64) bf16


def deal_rois(rois_np, nsegments):
    batch = rois_np.shape[0]
    indexes = [[] for _ in range(nsegments)]
    results = [[] for _ in range(nsegments)]
    for i in range(batch):
        for seg in range(nsegments):
            bbox = rois_np[i, seg, :].astype(np.int32)
            if bbox[0] == bbox[1] == bbox[2] == bbox[3] == 0:
                continue
            indexes[seg].append(i)
            results[seg].append(bbox)
    return indexes, results


def segments_separate_style_loss(inputs, targets, rois_np, vgg_params,
                                 nsegments=7, lambda_L1=1.0,
                                 lambda_perceptual=1.0, lambda_style=1.0):
    box_index_data, boxes_data = deal_rois(rois_np, nsegments)

    loss_l1 = l1_mean(inputs, targets) * lambda_L1

    prepared = prepare_vgg_params(vgg_params)
    fake_perc = vgg_submodel(inputs, prepared)    # normalization folded in
    real_perc = vgg_submodel(targets, prepared)   # "no grad" target branch

    loss_style = jnp.float32(0.0)
    for seg in range(nsegments):
        if len(boxes_data[seg]) == 0:
            continue
        out_hw = ROI_OUTPUT_SIZE[seg]
        fa = jnp.stack([roi_align(fake_perc[bi], bb, out_hw)
                        for bi, bb in zip(box_index_data[seg], boxes_data[seg])])
        fb = jnp.stack([roi_align(real_perc[bi], bb, out_hw)
                        for bi, bb in zip(box_index_data[seg], boxes_data[seg])])
        loss_style = loss_style + gram_mse_loss(fa, fb) * lambda_style

    loss_perceptual = l1_mean(fake_perc, real_perc) * lambda_perceptual
    loss = loss_l1 + loss_style + loss_perceptual
    return loss, loss_l1, loss_perceptual, loss_style


# ------------------------- demo -------------------------

if __name__ == "__main__":
    key = jax.random.PRNGKey(0)
    k_in, k_tg, k_vgg = jax.random.split(key, 3)

    B, C, H, W = 2, 3, 32, 32
    nsegments = 7
    inputs = jax.random.uniform(k_in, (B, C, H, W), jnp.float32, -1.0, 1.0)
    targets = jax.random.uniform(k_tg, (B, C, H, W), jnp.float32, -1.0, 1.0)
    vgg_params = init_vgg_params(k_vgg)

    # rois: (B, nsegments, 4) as (x1, y1, x2, y2) in feature-map coordinates
    base = [[2, 2, 20, 20], [1, 3, 9, 25], [20, 3, 28, 25], [0, 0, 31, 31],
            [4, 5, 12, 30], [18, 5, 26, 30], [6, 6, 22, 22]]
    rois_np = np.zeros((B, nsegments, 4), np.float32)
    for b in range(B):
        for s in range(nsegments):
            x1, y1, x2, y2 = base[s]
            rois_np[b, s] = [min(x1 + b, 30), min(y1 + b, 30),
                             min(x2 + b, 31), min(y2 + b, 31)]
    rois_np[1, 2] = 0.0   # all-zero bbox -> that (batch, segment) is skipped

    loss, loss_l1, loss_perc, loss_style = segments_separate_style_loss(
        inputs, targets, rois_np, vgg_params, nsegments=nsegments,
        lambda_L1=1.0, lambda_perceptual=1.0, lambda_style=1.0)
    jax.block_until_ready(loss)

    # sanity check: L1 term against plain JAX (f32 path, layout-independent)
    ref_l1 = jnp.mean(jnp.abs(inputs - targets))
    np.testing.assert_allclose(float(loss_l1), float(ref_l1),
                               rtol=1e-3, atol=1e-5)
    assert np.isfinite(float(loss)) and np.isfinite(float(loss_style))
    assert np.isfinite(float(loss_perc))

    print("KERNEL_OK")
</pallas_src>

<mosaic_0001>
module attributes {stable_mosaic.version = 11 : i64} {
  func.func @_l1_kernel(%arg0: i32, %arg1: memref<256x128xf32, #tpu.memory_space<vmem>>, %arg2: memref<256x128xf32, #tpu.memory_space<vmem>>, %arg3: memref<1x1xf32, #tpu.memory_space<vmem>>, %arg4: memref<8x128xf32, #tpu.memory_space<vmem>>) attributes {dimension_semantics = [#tpu.dimension_semantics<arbitrary>], iteration_bounds = array<i64: 1>, scalar_prefetch = 0 : i64, scratch_operands = 1 : i64, tpu.core_type = #tpu.core_type<tc>, window_params = [{transform_indices = @transform_0, window_bounds = array<i64: 256, 128>}, {transform_indices = @transform_1, window_bounds = array<i64: 256, 128>}, {pipeline_mode = #tpu.pipeline_mode<synchronous>, transform_indices = @transform_2, window_bounds = array<i64: 1, 1>}]} {
    %c0_i32 = arith.constant 0 : i32
    %0 = arith.cmpi eq, %arg0, %c0_i32 : i32
    %1 = arith.extui %0 : i1 to i32
    %c0_i32_0 = arith.constant 0 : i32
    %2 = arith.cmpi ne, %1, %c0_i32_0 : i32
    scf.if %2 {
      %cst_10 = arith.constant 0.000000e+00 : f32
      %15 = vector.broadcast %cst_10 : f32 to vector<8x128xf32>
      %c0_11 = arith.constant 0 : index
      %c0_12 = arith.constant 0 : index
      %16 = vector.load %arg4[%c0_11, %c0_12] : memref<8x128xf32, #tpu.memory_space<vmem>>, vector<8x128xf32>
      tpu.vector_store %arg4[%c0_11, %c0_12], %15 {strides = array<i32>} : memref<8x128xf32, #tpu.memory_space<vmem>>, vector<8x128xf32>,
    } else {
    }
    %c0 = arith.constant 0 : index
    %c0_1 = arith.constant 0 : index
    %3 = vector.load %arg1[%c0, %c0_1] : memref<256x128xf32, #tpu.memory_space<vmem>>, vector<256x128xf32>
    %c0_2 = arith.constant 0 : index
    %c0_3 = arith.constant 0 : index
    %4 = vector.load %arg2[%c0_2, %c0_3] : memref<256x128xf32, #tpu.memory_space<vmem>>, vector<256x128xf32>
    %5 = arith.subf %3, %4 : vector<256x128xf32>
    %6 = math.absf %5 : vector<256x128xf32>
    %c0_4 = arith.constant 0 : index
    %c0_5 = arith.constant 0 : index
    %7 = vector.load %arg4[%c0_4, %c0_5] : memref<8x128xf32, #tpu.memory_space<vmem>>, vector<8x128xf32>
    %8 = vector.shape_cast %6 : vector<256x128xf32> to vector<32x8x128xf32>
    %cst = arith.constant dense<0.000000e+00> : vector<8x128xf32>
    %9 = vector.multi_reduction <add>, %8, %cst [0] : vector<32x8x128xf32> to vector<8x128xf32>
    %10 = arith.addf %7, %9 : vector<8x128xf32>
    %c0_6 = arith.constant 0 : index
    %c0_7 = arith.constant 0 : index
    %11 = vector.load %arg4[%c0_6, %c0_7] : memref<8x128xf32, #tpu.memory_space<vmem>>, vector<8x128xf32>
    tpu.vector_store %arg4[%c0_6, %c0_7], %10 {strides = array<i32>} : memref<8x128xf32, #tpu.memory_space<vmem>>, vector<8x128xf32>,
    %c0_i32_8 = arith.constant 0 : i32
    %12 = arith.cmpi eq, %arg0, %c0_i32_8 : i32
    %13 = arith.extui %12 : i1 to i32
    %c0_i32_9 = arith.constant 0 : i32
    %14 = arith.cmpi ne, %13, %c0_i32_9 : i32
    scf.if %14 {
      %c0_10 = arith.constant 0 : index
      %c0_11 = arith.constant 0 : index
      %15 = vector.load %arg4[%c0_10, %c0_11] : memref<8x128xf32, #tpu.memory_space<vmem>>, vector<8x128xf32>
      %16 = vector.shape_cast %15 : vector<8x128xf32> to vector<1x8x128xf32>
      %cst_12 = arith.constant dense<0.000000e+00> : vector<1xf32>
      %17 = vector.multi_reduction <add>, %16, %cst_12 [1, 2] : vector<1x8x128xf32> to vector<1xf32>
      %18 = vector.shape_cast %17 : vector<1xf32> to vector<1x1x1xf32>
      %19 = vector.extract %18[0, 0, 0] : f32 from vector<1x1x1xf32>
      %20 = vector.broadcast %19 : f32 to vector<1x1xf32>
      %cst_13 = arith.constant 1.62760422E-4 : f32
      %21 = vector.broadcast %cst_13 : f32 to vector<1x1xf32>
      %22 = arith.mulf %20, %21 : vector<1x1xf32>
      %c0_14 = arith.constant 0 : index
      %c0_15 = arith.constant 0 : index
      %23 = vector.load %arg3[%c0_14, %c0_15] : memref<1x1xf32, #tpu.memory_space<vmem>>, vector<1x1xf32>
      tpu.vector_store %arg3[%c0_14, %c0_15], %22 {strides = array<i32>} : memref<1x1xf32, #tpu.memory_space<vmem>>, vector<1x1xf32>,
    } else {
    }
    return
  }
  func.func @transform_0(%arg0: i32) -> (i32, i32) {
    %c0_i32 = arith.constant 0 : i32
    %c0_i32_0 = arith.constant 0 : i32
    return %arg0, %c0_i32 : i32, i32
  }
  func.func @transform_1(%arg0: i32) -> (i32, i32) {
    %c0_i32 = arith.constant 0 : i32
    %c0_i32_0 = arith.constant 0 : i32
    return %arg0, %c0_i32 : i32, i32
  }
  func.func @transform_2(%arg0: i32) -> (i32, i32) {
    %c0_i32 = arith.constant 0 : i32
    %c0_i32_0 = arith.constant 0 : i32
    %c0_i32_1 = arith.constant 0 : i32
    return %c0_i32, %c0_i32_0 : i32, i32
  }
}

</mosaic_0001>

<llo_original>
// kernel: tpu_custom_call.1
$region0: #{tpu_custom_call.1}
  #allocation0 [shape = 'u32[]', space=smem, size = 0x4, offset = 0x4, fixed_abs, tag = 'smem constant byte address 0x4 - core index']
  #allocation1 [shape = 'u32[144,128]{1,0:T(1,128)}', space=vmem, size = 0x12000, scoped, tag = 'internal scratch']
  #allocation2 [shape = 'f32[8,128]{1,0:T(8,128)}', space=vmem, size = 0x1000, scoped, tag = 'scratch operand']
  %s0 = inlined_call_operand.hbm [shape: f32[256,128], index: 0, kind: input, shape index: {}]
  %s1 = inlined_call_operand.hbm [shape: f32[256,128], index: 1, kind: input, shape index: {}]
  %s2 = inlined_call_operand.hbm [shape: f32[1,1], index: 2, kind: output, shape index: {}]
  %s3 = sld [smem:[#allocation0]]
  $region34: #{tpu_custom_call.1} parent=0
    _
  %s5 = ssub.s32 1, %s3
  %s6 = scalar_select 0, %s5, %s3
  $region1: #{tpu_custom_call.1} parent=0
    #allocation3 [shape = 'u8[131072]{0}', space=vmem, size = 0x20000, scoped, tag = 'input window, operand 0, single buffered']
    #allocation4 [shape = 's32[1]{0}', space=sflag, size = 0x4, scoped, tag = 'scoped memory for tpu_custom_call.1']
    #allocation5 [shape = 's32[1]{0}', space=sflag, size = 0x4, scoped, tag = 'scoped memory for tpu_custom_call.1']
    #allocation6 [shape = 'u8[131072]{0}', space=vmem, size = 0x20000, scoped, tag = 'input window, operand 1, single buffered']
    #allocation7 [shape = 's32[1]{0}', space=sflag, size = 0x4, scoped, tag = 'scoped memory for tpu_custom_call.1']
    #allocation8 [shape = 'u8[512]{0}', space=vmem, size = 0x400, scoped, tag = 'output window, operand 0, single buffered']
    %7 = vsyncpa [#allocation4], 0
    %8 = vsyncpa [#allocation7], 0
    %9 = vsyncpa [#allocation5], 0
    // Predicated region
    $region2: #{tpu_custom_call.1} parent=1 // pred_check
      _
    $region3: #{tpu_custom_call.1} parent=1 // pred_check_branch
      %11 = sbr.rel (0) target = $region5
    $region4: #{tpu_custom_call.1} parent=1 // pred_region
      %s13 = ssub.s32 4096, 4096
      %14 = vsyncadd [#allocation4], %s13
      %s15 = sshll.u32 [#allocation3], 4
      %s16 = int_to_ptr.vmem [resolvable:$true] %s15
      %21 = dma.hbm_to_vmem [thread:$0]  %s0, 4096, %s16, [#allocation4], 128, 128, 8
    $region5: #{tpu_custom_call.1} parent=1 // pred_fallthru
      _
    // Predicated region
    $region6: #{tpu_custom_call.1} parent=1 // pred_check
      _
    $region7: #{tpu_custom_call.1} parent=1 // pred_check_branch
      %23 = sbr.rel (0) target = $region9
    $region8: #{tpu_custom_call.1} parent=1 // pred_region
      %s25 = ssub.s32 4096, 4096
      %26 = vsyncadd [#allocation7], %s25
      %s27 = sshll.u32 [#allocation6], 4
      %s28 = int_to_ptr.vmem [resolvable:$true] %s27
      %33 = dma.hbm_to_vmem [thread:$0]  %s1, 4096, %s28, [#allocation7], 128, 128, 8
    $region9: #{tpu_custom_call.1} parent=1 // pred_fallthru
      _
    // Predicated region
    $region10: #{tpu_custom_call.1} parent=1 // pred_check
      _
    $region11: #{tpu_custom_call.1} parent=1 // pred_check_branch
      %35 = sbr.rel (0) target = $region13
    $region12: #{tpu_custom_call.1} parent=1 // pred_region
      %36 = dma.done [#allocation4], 4096
    $region13: #{tpu_custom_call.1} parent=1 // pred_fallthru
      _
    // Predicated region
    $region14: #{tpu_custom_call.1} parent=1 // pred_check
      _
    $region15: #{tpu_custom_call.1} parent=1 // pred_check_branch
      %38 = sbr.rel (0) target = $region17
    $region16: #{tpu_custom_call.1} parent=1 // pred_region
      %39 = dma.done [#allocation7], 4096
    $region17: #{tpu_custom_call.1} parent=1 // pred_fallthru
      _
    %p40 = scmp.eq.s32.totalorder 0, 0
    // Predicated region
    $region18: #{tpu_custom_call.1} parent=1 // pred_check
      %p41 = pneg %p40
    $region19: #{tpu_custom_call.1} parent=1 // pred_check_branch
      %43 = sbr.rel (%p41) target = $region21
    $region20: #{tpu_custom_call.1} parent=1 // pred_region
      %44 = vst [vmem:[#allocation2] sm:$0xff] 0.0
    $region21: #{tpu_custom_call.1} parent=1 // pred_fallthru
      _
    %v45 = vld [vmem:[#allocation3] sm:$0xff]
    %v46 = vld [vmem:[#allocation3 + $0x8] sm:$0xff]
    %v47 = vld [vmem:[#allocation3 + $0x10] sm:$0xff]
    %v48 = vld [vmem:[#allocation3 + $0x18] sm:$0xff]
    %v49 = vld [vmem:[#allocation3 + $0x20] sm:$0xff]
    %v50 = vld [vmem:[#allocation3 + $0x28] sm:$0xff]
    %v51 = vld [vmem:[#allocation3 + $0x30] sm:$0xff]
    %v52 = vld [vmem:[#allocation3 + $0x38] sm:$0xff]
    %v53 = vld [vmem:[#allocation3 + $0x40] sm:$0xff]
    %v54 = vld [vmem:[#allocation3 + $0x48] sm:$0xff]
    %v55 = vld [vmem:[#allocation3 + $0x50] sm:$0xff]
    %v56 = vld [vmem:[#allocation3 + $0x58] sm:$0xff]
    %v57 = vld [vmem:[#allocation3 + $0x60] sm:$0xff]
    %v58 = vld [vmem:[#allocation3 + $0x68] sm:$0xff]
    %v59 = vld [vmem:[#allocation3 + $0x70] sm:$0xff]
    %v60 = vld [vmem:[#allocation3 + $0x78] sm:$0xff]
    %v61 = vld [vmem:[#allocation3 + $0x80] sm:$0xff]
    %v62 = vld [vmem:[#allocation3 + $0x88] sm:$0xff]
    %v63 = vld [vmem:[#allocation3 + $0x90] sm:$0xff]
    %v64 = vld [vmem:[#allocation3 + $0x98] sm:$0xff]
    %v65 = vld [vmem:[#allocation3 + $0xa0] sm:$0xff]
    %v66 = vld [vmem:[#allocation3 + $0xa8] sm:$0xff]
    %v67 = vld [vmem:[#allocation3 + $0xb0] sm:$0xff]
    %v68 = vld [vmem:[#allocation3 + $0xb8] sm:$0xff]
    %v69 = vld [vmem:[#allocation3 + $0xc0] sm:$0xff]
    %v70 = vld [vmem:[#allocation3 + $0xc8] sm:$0xff]
    %v71 = vld [vmem:[#allocation3 + $0xd0] sm:$0xff]
    %v72 = vld [vmem:[#allocation3 + $0xd8] sm:$0xff]
    %v73 = vld [vmem:[#allocation3 + $0xe0] sm:$0xff]
    %v74 = vld [vmem:[#allocation3 + $0xe8] sm:$0xff]
    %v75 = vld [vmem:[#allocation3 + $0xf0] sm:$0xff]
    %v76 = vld [vmem:[#allocation3 + $0xf8] sm:$0xff]
    %v77 = vld [vmem:[#allocation6] sm:$0xff]
    %v78 = vld [vmem:[#allocation6 + $0x8] sm:$0xff]
    %v79 = vld [vmem:[#allocation6 + $0x10] sm:$0xff]
    %v80 = vld [vmem:[#allocation6 + $0x18] sm:$0xff]
    %v81 = vld [vmem:[#allocation6 + $0x20] sm:$0xff]
    %v82 = vld [vmem:[#allocation6 + $0x28] sm:$0xff]
    %v83 = vld [vmem:[#allocation6 + $0x30] sm:$0xff]
    %v84 = vld [vmem:[#allocation6 + $0x38] sm:$0xff]
    %v85 = vld [vmem:[#allocation6 + $0x40] sm:$0xff]
    %v86 = vld [vmem:[#allocation6 + $0x48] sm:$0xff]
    %v87 = vld [vmem:[#allocation6 + $0x50] sm:$0xff]
    %v88 = vld [vmem:[#allocation6 + $0x58] sm:$0xff]
    %v89 = vld [vmem:[#allocation6 + $0x60] sm:$0xff]
    %v90 = vld [vmem:[#allocation6 + $0x68] sm:$0xff]
    %v91 = vld [vmem:[#allocation6 + $0x70] sm:$0xff]
    %v92 = vld [vmem:[#allocation6 + $0x78] sm:$0xff]
    %v93 = vld [vmem:[#allocation6 + $0x80] sm:$0xff]
    %v94 = vld [vmem:[#allocation6 + $0x88] sm:$0xff]
    %v95 = vld [vmem:[#allocation6 + $0x90] sm:$0xff]
    %v96 = vld [vmem:[#allocation6 + $0x98] sm:$0xff]
    %v97 = vld [vmem:[#allocation6 + $0xa0] sm:$0xff]
    %v98 = vld [vmem:[#allocation6 + $0xa8] sm:$0xff]
    %v99 = vld [vmem:[#allocation6 + $0xb0] sm:$0xff]
    %v100 = vld [vmem:[#allocation6 + $0xb8] sm:$0xff]
    %v101 = vld [vmem:[#allocation6 + $0xc0] sm:$0xff]
    %v102 = vld [vmem:[#allocation6 + $0xc8] sm:$0xff]
    %v103 = vld [vmem:[#allocation6 + $0xd0] sm:$0xff]
    %v104 = vld [vmem:[#allocation6 + $0xd8] sm:$0xff]
    %v105 = vld [vmem:[#allocation6 + $0xe0] sm:$0xff]
    %v106 = vld [vmem:[#allocation6 + $0xe8] sm:$0xff]
    %v107 = vld [vmem:[#allocation6 + $0xf0] sm:$0xff]
    %v108 = vld [vmem:[#allocation6 + $0xf8] sm:$0xff]
    %v109 = vsub.f32 %v45, %v77
    %v110 = vsub.f32 %v46, %v78
    %v111 = vsub.f32 %v47, %v79
    %v112 = vsub.f32 %v48, %v80
    %v113 = vsub.f32 %v49, %v81
    %v114 = vsub.f32 %v50, %v82
    %v115 = vsub.f32 %v51, %v83
    %v116 = vsub.f32 %v52, %v84
    %v117 = vsub.f32 %v53, %v85
    %v118 = vsub.f32 %v54, %v86
    %v119 = vsub.f32 %v55, %v87
    %v120 = vsub.f32 %v56, %v88
    %v121 = vsub.f32 %v57, %v89
    %v122 = vsub.f32 %v58, %v90
    %v123 = vsub.f32 %v59, %v91
    %v124 = vsub.f32 %v60, %v92
    %v125 = vsub.f32 %v61, %v93
    %v126 = vsub.f32 %v62, %v94
    %v127 = vsub.f32 %v63, %v95
    %v128 = vsub.f32 %v64, %v96
    %v129 = vsub.f32 %v65, %v97
    %v130 = vsub.f32 %v66, %v98
    %v131 = vsub.f32 %v67, %v99
    %v132 = vsub.f32 %v68, %v100
    %v133 = vsub.f32 %v69, %v101
    %v134 = vsub.f32 %v70, %v102
    %v135 = vsub.f32 %v71, %v103
    %v136 = vsub.f32 %v72, %v104
    %v137 = vsub.f32 %v73, %v105
    %v138 = vsub.f32 %v74, %v106
    %v139 = vsub.f32 %v75, %v107
    %v140 = vsub.f32 %v76, %v108
    %v141 = vand.u32 2147483647, %v109
    %v142 = vand.u32 2147483647, %v110
    %v143 = vand.u32 2147483647, %v111
    %v144 = vand.u32 2147483647, %v112
    %v145 = vand.u32 2147483647, %v113
    %v146 = vand.u32 2147483647, %v114
    %v147 = vand.u32 2147483647, %v115
    %v148 = vand.u32 2147483647, %v116
    %v149 = vand.u32 2147483647, %v117
    %v150 = vand.u32 2147483647, %v118
    %v151 = vand.u32 2147483647, %v119
    %v152 = vand.u32 2147483647, %v120
    %v153 = vand.u32 2147483647, %v121
    %v154 = vand.u32 2147483647, %v122
    %v155 = vand.u32 2147483647, %v123
    %v156 = vand.u32 2147483647, %v124
    %v157 = vand.u32 2147483647, %v125
    %v158 = vand.u32 2147483647, %v126
    %v159 = vand.u32 2147483647, %v127
    %v160 = vand.u32 2147483647, %v128
    %v161 = vand.u32 2147483647, %v129
    %v162 = vand.u32 2147483647, %v130
    %v163 = vand.u32 2147483647, %v131
    %v164 = vand.u32 2147483647, %v132
    %v165 = vand.u32 2147483647, %v133
    %v166 = vand.u32 2147483647, %v134
    %v167 = vand.u32 2147483647, %v135
    %v168 = vand.u32 2147483647, %v136
    %v169 = vand.u32 2147483647, %v137
    %v170 = vand.u32 2147483647, %v138
    %v171 = vand.u32 2147483647, %v139
    %v172 = vand.u32 2147483647, %v140
    %v173 = vld [vmem:[#allocation2] sm:$0xff]
    %v174 = vadd.f32 %v141, %v142
    %v175 = vadd.f32 %v174, %v143
    %v176 = vadd.f32 %v175, %v144
    %v177 = vadd.f32 %v176, %v145
    %v178 = vadd.f32 %v177, %v146
    %v179 = vadd.f32 %v178, %v147
    %v180 = vadd.f32 %v179, %v148
    %v181 = vadd.f32 %v180, %v149
    %v182 = vadd.f32 %v181, %v150
    %v183 = vadd.f32 %v182, %v151
    %v184 = vadd.f32 %v183, %v152
    %v185 = vadd.f32 %v184, %v153
    %v186 = vadd.f32 %v185, %v154
    %v187 = vadd.f32 %v186, %v155
    %v188 = vadd.f32 %v187, %v156
    %v189 = vadd.f32 %v188, %v157
    %v190 = vadd.f32 %v189, %v158
    %v191 = vadd.f32 %v190, %v159
    %v192 = vadd.f32 %v191, %v160
    %v193 = vadd.f32 %v192, %v161
    %v194 = vadd.f32 %v193, %v162
    %v195 = vadd.f32 %v194, %v163
    %v196 = vadd.f32 %v195, %v164
    %v197 = vadd.f32 %v196, %v165
    %v198 = vadd.f32 %v197, %v166
    %v199 = vadd.f32 %v198, %v167
    %v200 = vadd.f32 %v199, %v168
    %v201 = vadd.f32 %v200, %v169
    %v202 = vadd.f32 %v201, %v170
    %v203 = vadd.f32 %v202, %v171
    %v204 = vadd.f32 %v203, %v172
    %v205 = vadd.f32 %v173, %v204
    %206 = vst [vmem:[#allocation2] sm:$0xff] %v205
    // Predicated region
    $region22: #{tpu_custom_call.1} parent=1 // pred_check
      %p207 = pneg %p40
    $region23: #{tpu_custom_call.1} parent=1 // pred_check_branch
      %209 = sbr.rel (%p207) target = $region25
    $region24: #{tpu_custom_call.1} parent=1 // pred_region
      %v210 = vld [vmem:[#allocation2] sm:$0xff]
      %211 = vadd.xlane.f32.xlu0 %v210
      %v212 = vpop.xlane.xlu0 %211
      %v213 = vrot.slane %v212, 4
      %v214 = vadd.f32 %v212, %v213
      %v215 = vrot.slane %v214, 2
      %v216 = vadd.f32 %v214, %v215
      %v217 = vrot.slane %v216, 1
      %v218 = vadd.f32 %v216, %v217
      %s219 = vtos %v218
      %v220 = vstv %s219
      %v221 = vmul.f32 %v220, 0.00016276042
      %vm222 = vcmask 0
      %223 = vst.msk [vmem:[#allocation8] sm:$0x1] %vm222, %v221
    $region25: #{tpu_custom_call.1} parent=1 // pred_fallthru
      _
    // Predicated region
    $region26: #{tpu_custom_call.1} parent=1 // pred_check
      _
    $region27: #{tpu_custom_call.1} parent=1 // pred_check_branch
      %225 = sbr.rel (0) target = $region29
    $region28: #{tpu_custom_call.1} parent=1 // pred_region
      %s227 = ssub.s32 16, 16
      %228 = vsyncadd [#allocation5], %s227
      %s230 = sshll.u32 [#allocation8], 4
      %s231 = int_to_ptr.vmem [resolvable:$true] %s230
      %233 = dma.vmem_to_hbm [thread:$0]  %s231, 16, %s2, [#allocation5]
    $region29: #{tpu_custom_call.1} parent=1 // pred_fallthru
      _
    // Predicated region
    $region30: #{tpu_custom_call.1} parent=1 // pred_check
      _
    $region31: #{tpu_custom_call.1} parent=1 // pred_check_branch
      %235 = sbr.rel (0) target = $region33
    $region32: #{tpu_custom_call.1} parent=1 // pred_region
      %236 = dma.done [#allocation5], 16
    $region33: #{tpu_custom_call.1} parent=1 // pred_fallthru
      _
    %237 = vsyncpa [#allocation4], 1
    %238 = vsyncpa [#allocation7], 1
    %239 = vsyncpa [#allocation5], 1

</llo_original>
